<compile_context>
chip_gen: v7x
topology: tpu7x:2x2x1
jax: 0.10.0
libtpu: 0.0.40
codegen_flags: <defaults>
</compile_context>

<pallas_src>
import functools

import jax
import jax.numpy as jnp
from jax.experimental import pallas as pl
from jax.experimental.pallas import tpu as pltpu


def _attention_kernel(*refs, bb, t, s, h, o, project_query, has_mask):
    if has_mask:
        ht_ref, hs_ref, src_ref, wa_ref, wc1_ref, wc2_ref, b_ref, out_ref = refs
    else:
        ht_ref, hs_ref, wa_ref, wc1_ref, wc2_ref, b_ref, out_ref = refs
        src_ref = None

    dtype = ht_ref.dtype            # MXU operand dtype (bf16 stays bf16)
    ht3 = ht_ref[...]               # (T, bb, H)  original seq-major layout
    hs3 = hs_ref[...]               # (S, bb, H)
    wa = wa_ref[...]                # (H, H); pre-transposed in wrapper if project_query

    # ---- project the shorter side with one tall-M folded-row matmul --------
    # score[b,t,s] = sum_l ht[t,b,l] * (hs@W_a)[s,b,l]
    #             == sum_k (ht@W_a^T)[t,b,k] * hs[s,b,k]
    if project_query:
        q2 = jnp.dot(ht3.reshape(t * bb, h), wa,
                     preferred_element_type=jnp.float32)
        q3 = q2.reshape(t, bb, h).astype(dtype)      # (T, bb, H)
        k3 = hs3                                      # (S, bb, H)
    else:
        k2 = jnp.dot(hs3.reshape(s * bb, h), wa,
                     preferred_element_type=jnp.float32)
        k3 = k2.reshape(s, bb, h).astype(dtype)      # (S, bb, H)
        q3 = ht3

    # ---- batch-major fold done in VMEM (XLU relayout), never via HBM --------
    qb = jnp.transpose(q3, (1, 0, 2))                # (bb, T, H)
    kb = jnp.transpose(k3, (1, 0, 2))                # (bb, S, H)
    hsb = kb if project_query else jnp.transpose(hs3, (1, 0, 2))   # raw hs, batch-major

    score = jnp.einsum('btd,bsd->bts', qb, kb,
                       preferred_element_type=jnp.float32)          # (bb, T, S) f32

    # ---- softmax over source positions (f32 on VPU/EUP) --------------------
    score = score - jnp.max(score, axis=-1, keepdims=True)
    p = jnp.exp(score)
    if has_mask:
        keep = src_ref[...] != 0                     # (bb, 1, S)
        p = jnp.where(keep, p, 0.0)                  # masked_fill after exp (torch order)
    denom = jnp.sum(p, axis=-1, keepdims=True)       # (bb, T, 1)
    a = p * pl.reciprocal(denom, approx=False)       # EUP reciprocal (exact)

    # ---- context + output projection ---------------------------------------
    c = jnp.einsum('bts,bsd->btd', a.astype(dtype), hsb,
                   preferred_element_type=jnp.float32)              # (bb, T, H) f32
    c2 = jnp.transpose(c, (1, 0, 2)).reshape(t * bb, h).astype(dtype)  # (T*bb, H)
    ht2 = ht3.reshape(t * bb, h)                                        # (T*bb, H)

    # concat([c, ht]) @ W_c as two summed dots (same total K, no lane-crossing
    # concat relayout; second dot accumulates in the MXU result buffer).
    out = (jnp.dot(c2, wc1_ref[...], preferred_element_type=jnp.float32)
           + jnp.dot(ht2, wc2_ref[...], preferred_element_type=jnp.float32)
           + b_ref[...].astype(jnp.float32))
    out = jnp.tanh(out)                                                 # (T*bb, O) f32

    out_ref[...] = out.reshape(t, bb, o).astype(out_ref.dtype)   # native (T, bb, O) store


def _round_up(x, m):
    return ((x + m - 1) // m) * m


def _vmem_capacity_bytes():
    try:
        return int(pltpu.get_tpu_info().vmem_capacity_bytes)
    except Exception:
        return 64 * 1024 * 1024      # conservative (v7x-sized) fallback


def _pick_block_batch(batch, t, s, h, o, itemsize, vmem_cap):
    """Choose the per-step batch block.

    * bb must divide B, and be a multiple of 8 (sublane-dense second-minor dim)
      or equal B.
    * 64-MiB VMEM parts (v7x-class, 2 TCs): prefer >= 4 grid steps and ~256
      folded rows per step so both TensorCores get pipelined work.
    * 128-MiB single-TC parts (v5e/v6e): prefer fewer, fatter blocks
      (~1024 folded rows) to amortize the ~0.35 us/step pipeline overhead.
    """
    small_vmem = vmem_cap <= 64 * 1024 * 1024
    target_rows = 256 if small_vmem else 1024
    min_steps = 4 if small_vmem else 1
    budget = int(vmem_cap * 0.5)     # headroom: compiler scratch, double-buffer slack

    def fits(bb):
        io = 2 * bb * (t * h + s * h + s + t * o) * itemsize   # double-buffered blocks
        interm = bb * t * (3 * s + 2 * h) * 4                  # f32 score/p/a + context
        weights = (h * h + 2 * h * o + o) * itemsize
        return io + interm + weights <= budget

    divisors = [d for d in range(1, batch + 1) if batch % d == 0]
    layout_ok = [d for d in divisors if d % 8 == 0 or d == batch]
    valid = [d for d in layout_ok if fits(d)] or [min(layout_ok)]
    cands = [d for d in valid if d * t <= target_rows] or [min(valid)]
    stepped = [d for d in cands if batch // d >= min_steps] or cands
    return max(stepped)


def attention_forward(ht, hs, W_a, W_c, b, source=None, block_b=None):
    """ht: (T, B, H), hs: (S, B, H), W_a: (H, H), W_c: (2H, O), b: (O,).
    source: optional (S, B); positions where source == 0 get zero attention.
    Returns (T, B, O), matching the PyTorch module."""
    T, B, H = ht.shape
    S = hs.shape[0]
    O = W_c.shape[1]
    dtype = ht.dtype
    itemsize = jnp.dtype(dtype).itemsize

    vmem_cap = _vmem_capacity_bytes()
    vmem_limit = int(vmem_cap * 0.8)       # leave headroom below physical VMEM

    # Lane-dense output only when the padding is cheap (<= 50% extra lanes);
    # with small O the native masked store costs less HBM traffic than
    # padding to 128 and slicing in the wrapper.
    O_pad = _round_up(O, 128)
    pad_out = (O_pad != O) and (2 * O_pad <= 3 * O)
    if not pad_out:
        O_pad = O

    bb = block_b if block_b is not None else _pick_block_batch(
        B, T, S, H, O_pad, itemsize, vmem_cap)
    assert B % bb == 0
    bg = B // bb

    project_query = T <= S
    wa_arg = (W_a.T if project_query else W_a).astype(dtype)   # tiny (H,H) weight prep
    wc1 = W_c[:H].astype(dtype)                                 # (H, O)
    wc2 = W_c[H:].astype(dtype)                                 # (H, O)
    b2d = b.reshape(1, O)
    if pad_out:
        wc1 = jnp.pad(wc1, ((0, 0), (0, O_pad - O)))
        wc2 = jnp.pad(wc2, ((0, 0), (0, O_pad - O)))
        b2d = jnp.pad(b2d, ((0, 0), (0, O_pad - O)))

    has_mask = source is not None
    inputs = [ht, hs]                       # original layouts; no HBM transposes
    in_specs = [
        pl.BlockSpec((T, bb, H), lambda i: (0, i, 0)),   # ht (T, B, H)
        pl.BlockSpec((S, bb, H), lambda i: (0, i, 0)),   # hs (S, B, H)
    ]
    if has_mask:
        # Mask is tiny (S*B ints): the wrapper transpose is negligible HBM traffic.
        src_b = jnp.transpose(source, (1, 0)).astype(jnp.int32).reshape(B, 1, S)
        inputs.append(src_b)
        in_specs.append(pl.BlockSpec((bb, 1, S), lambda i: (i, 0, 0)))
    inputs += [wa_arg, wc1, wc2, b2d]
    in_specs += [
        pl.BlockSpec((H, H), lambda i: (0, 0)),          # W_a (or W_a^T)
        pl.BlockSpec((H, O_pad), lambda i: (0, 0)),      # W_c[:H]
        pl.BlockSpec((H, O_pad), lambda i: (0, 0)),      # W_c[H:]
        pl.BlockSpec((1, O_pad), lambda i: (0, 0)),      # b
    ]
    # TODO(synk): on v5e consider pipeline_mode=pl.Buffered(3) on the ht/hs
    # specs (slowest HBM) when VMEM allows.

    kernel = functools.partial(
        _attention_kernel, bb=bb, t=T, s=S, h=H, o=O_pad,
        project_query=project_query, has_mask=has_mask)

    out = pl.pallas_call(
        kernel,
        out_shape=jax.ShapeDtypeStruct((T, B, O_pad), dtype),
        grid_spec=pltpu.PrefetchScalarGridSpec(
            num_scalar_prefetch=0,
            grid=(bg,),
            in_specs=in_specs,
            out_specs=pl.BlockSpec((T, bb, O_pad), lambda i: (0, i, 0)),
        ),
        compiler_params=pltpu.CompilerParams(
            dimension_semantics=("parallel",),
            vmem_limit_bytes=vmem_limit,
        ),
    )(*inputs)

    return out[..., :O] if pad_out else out


def _reference_forward(ht, hs, W_a, W_c, b, source=None):
    score = jnp.einsum('jik,kl->jil', hs, W_a)
    score = jnp.einsum('jik,lik->jil', ht, score)
    score = score - jnp.max(score, axis=-1, keepdims=True)
    score = jnp.exp(score)
    if source is not None:
        mask = (source.T == 0)[None, :, :]       # (1, B, S)
        score = jnp.where(mask, 0.0, score)
    a = score / jnp.sum(score, axis=-1, keepdims=True)
    c = jnp.einsum('jik,kil->jil', a, hs)
    h = jnp.concatenate((c, ht), -1)
    return jnp.tanh(jnp.einsum('jik,kl->jil', h, W_c) + b)


if __name__ == "__main__":
    # Small deterministic config
    T = 8          # target sequence length
    S = 12         # source sequence length
    B = 4          # batch
    H = 32         # hidden_dim
    O = 16         # output_dim

    key = jax.random.PRNGKey(0)
    k_ht, k_hs, k_wa, k_wc = jax.random.split(key, 4)

    ht = jax.random.normal(k_ht, (T, B, H), dtype=jnp.float32)
    hs = jax.random.normal(k_hs, (S, B, H), dtype=jnp.float32)

    # Xavier-normal init (matches nn.init.xavier_normal_)
    std_wa = (2.0 / (H + H)) ** 0.5
    std_wc = (2.0 / (2 * H + O)) ** 0.5
    W_a = std_wa * jax.random.normal(k_wa, (H, H), dtype=jnp.float32)
    W_c = std_wc * jax.random.normal(k_wc, (2 * H, O), dtype=jnp.float32)
    b = jnp.zeros((O,), dtype=jnp.float32)

    ATOL = RTOL = 1e-3

    # Path 1: no source mask (project-query path, T <= S)
    out = jax.block_until_ready(attention_forward(ht, hs, W_a, W_c, b))
    ref = _reference_forward(ht, hs, W_a, W_c, b)
    assert out.shape == (T, B, O)
    assert jnp.allclose(out, ref, atol=ATOL, rtol=RTOL), "mismatch (no mask)"

    # Path 2: padded source mask (source == 0 positions get zero attention)
    lengths = jnp.array([S, 9, S, 7], dtype=jnp.int32)
    source = (jnp.arange(S)[:, None] < lengths[None, :]).astype(jnp.int32)  # (S, B)
    out_m = jax.block_until_ready(
        attention_forward(ht, hs, W_a, W_c, b, source=source))
    ref_m = _reference_forward(ht, hs, W_a, W_c, b, source=source)
    assert jnp.allclose(out_m, ref_m, atol=ATOL, rtol=RTOL), "mismatch (masked)"

    # Path 3: T > S exercises the project-key branch
    ht_l = jax.random.normal(k_ht, (S, B, H), dtype=jnp.float32)   # T'=12
    hs_s = jax.random.normal(k_hs, (T, B, H), dtype=jnp.float32)   # S'=8
    out_k = jax.block_until_ready(attention_forward(ht_l, hs_s, W_a, W_c, b))
    ref_k = _reference_forward(ht_l, hs_s, W_a, W_c, b)
    assert jnp.allclose(out_k, ref_k, atol=ATOL, rtol=RTOL), "mismatch (T > S)"

    print("KERNEL_OK")
</pallas_src>

<mosaic_0001>
module attributes {stable_mosaic.version = 11 : i64} {
  func.func @_attention_kernel(%arg0: i32, %arg1: memref<8x4x32xf32, #tpu.memory_space<vmem>>, %arg2: memref<12x4x32xf32, #tpu.memory_space<vmem>>, %arg3: memref<32x32xf32, #tpu.memory_space<vmem>>, %arg4: memref<32x16xf32, #tpu.memory_space<vmem>>, %arg5: memref<32x16xf32, #tpu.memory_space<vmem>>, %arg6: memref<1x16xf32, #tpu.memory_space<vmem>>, %arg7: memref<8x4x16xf32, #tpu.memory_space<vmem>>) attributes {dimension_semantics = [#tpu.dimension_semantics<parallel>], iteration_bounds = array<i64: 1>, scalar_prefetch = 0 : i64, scratch_operands = 0 : i64, tpu.core_type = #tpu.core_type<tc>, window_params = [{transform_indices = @transform_0, window_bounds = array<i64: 8, 4, 32>}, {transform_indices = @transform_1, window_bounds = array<i64: 12, 4, 32>}, {pipeline_mode = #tpu.pipeline_mode<synchronous>, transform_indices = @transform_2, window_bounds = array<i64: 32, 32>}, {pipeline_mode = #tpu.pipeline_mode<synchronous>, transform_indices = @transform_3, window_bounds = array<i64: 32, 16>}, {pipeline_mode = #tpu.pipeline_mode<synchronous>, transform_indices = @transform_4, window_bounds = array<i64: 32, 16>}, {pipeline_mode = #tpu.pipeline_mode<synchronous>, transform_indices = @transform_5, window_bounds = array<i64: 1, 16>}, {transform_indices = @transform_6, window_bounds = array<i64: 8, 4, 16>}]} {
    %c0 = arith.constant 0 : index
    %c0_0 = arith.constant 0 : index
    %c0_1 = arith.constant 0 : index
    %0 = vector.load %arg1[%c0, %c0_0, %c0_1] : memref<8x4x32xf32, #tpu.memory_space<vmem>>, vector<8x4x32xf32>
    %c0_2 = arith.constant 0 : index
    %c0_3 = arith.constant 0 : index
    %c0_4 = arith.constant 0 : index
    %1 = vector.load %arg2[%c0_2, %c0_3, %c0_4] : memref<12x4x32xf32, #tpu.memory_space<vmem>>, vector<12x4x32xf32>
    %c0_5 = arith.constant 0 : index
    %c0_6 = arith.constant 0 : index
    %2 = vector.load %arg3[%c0_5, %c0_6] : memref<32x32xf32, #tpu.memory_space<vmem>>, vector<32x32xf32>
    %3 = vector.shape_cast %0 : vector<8x4x32xf32> to vector<32x32xf32>
    %cst = arith.constant dense<0.000000e+00> : vector<32x32xf32>
    %4 = tpu.matmul %3, %2, %cst {dimension_numbers = #tpu.dot_dimension_numbers<[1], [0], [0], [1], [0, 0, 1, 1], [], []>} : vector<32x32xf32>, vector<32x32xf32>, vector<32x32xf32> -> vector<32x32xf32>
    %5 = vector.shape_cast %4 : vector<32x32xf32> to vector<8x4x32xf32>
    %6 = tpu.transpose %5, [1, 0, 2] : vector<8x4x32xf32> -> vector<4x8x32xf32>
    %7 = tpu.transpose %1, [1, 0, 2] : vector<12x4x32xf32> -> vector<4x12x32xf32>
    "tpu.trace_start"() <{level = 10 : i32, message = "btd,bsd->bts"}> : () -> ()
    %cst_7 = arith.constant dense<0.000000e+00> : vector<4x8x12xf32>
    %8 = tpu.matmul %6, %7, %cst_7 {dimension_numbers = #tpu.dot_dimension_numbers<[2], [2], [1], [1], [0, 0, 0, 1, 1, 1], [0], [0]>} : vector<4x8x32xf32>, vector<4x12x32xf32>, vector<4x8x12xf32> -> vector<4x8x12xf32>
    "tpu.trace_stop"() : () -> ()
    %cst_8 = arith.constant dense<0xFF800000> : vector<4x8xf32>
    %9 = vector.multi_reduction <maximumf>, %8, %cst_8 [2] : vector<4x8x12xf32> to vector<4x8xf32>
    %10 = vector.shape_cast %9 : vector<4x8xf32> to vector<4x8x1xf32>
    %11 = vector.broadcast %10 : vector<4x8x1xf32> to vector<4x8x12xf32>
    %12 = arith.subf %8, %11 : vector<4x8x12xf32>
    %13 = math.exp %12 : vector<4x8x12xf32>
    %cst_9 = arith.constant dense<0.000000e+00> : vector<4x8xf32>
    %14 = vector.multi_reduction <add>, %13, %cst_9 [2] : vector<4x8x12xf32> to vector<4x8xf32>
    %15 = vector.shape_cast %14 : vector<4x8xf32> to vector<4x8x1xf32>
    %16 = tpu.reciprocal %15 : vector<4x8x1xf32> -> vector<4x8x1xf32>
    %17 = vector.broadcast %16 : vector<4x8x1xf32> to vector<4x8x12xf32>
    %18 = arith.mulf %13, %17 : vector<4x8x12xf32>
    "tpu.trace_start"() <{level = 10 : i32, message = "bts,bsd->btd"}> : () -> ()
    %cst_10 = arith.constant dense<0.000000e+00> : vector<4x8x32xf32>
    %19 = tpu.matmul %18, %7, %cst_10 {dimension_numbers = #tpu.dot_dimension_numbers<[2], [1], [1], [2], [0, 0, 0, 1, 1, 2], [0], [0]>} : vector<4x8x12xf32>, vector<4x12x32xf32>, vector<4x8x32xf32> -> vector<4x8x32xf32>
    "tpu.trace_stop"() : () -> ()
    %20 = tpu.transpose %19, [1, 0, 2] : vector<4x8x32xf32> -> vector<8x4x32xf32>
    %21 = vector.shape_cast %20 : vector<8x4x32xf32> to vector<32x32xf32>
    %22 = vector.shape_cast %0 : vector<8x4x32xf32> to vector<32x32xf32>
    %c0_11 = arith.constant 0 : index
    %c0_12 = arith.constant 0 : index
    %23 = vector.load %arg4[%c0_11, %c0_12] : memref<32x16xf32, #tpu.memory_space<vmem>>, vector<32x16xf32>
    %cst_13 = arith.constant dense<0.000000e+00> : vector<32x16xf32>
    %24 = tpu.matmul %21, %23, %cst_13 {dimension_numbers = #tpu.dot_dimension_numbers<[1], [0], [0], [1], [0, 0, 1, 1], [], []>} : vector<32x32xf32>, vector<32x16xf32>, vector<32x16xf32> -> vector<32x16xf32>
    %c0_14 = arith.constant 0 : index
    %c0_15 = arith.constant 0 : index
    %25 = vector.load %arg5[%c0_14, %c0_15] : memref<32x16xf32, #tpu.memory_space<vmem>>, vector<32x16xf32>
    %cst_16 = arith.constant dense<0.000000e+00> : vector<32x16xf32>
    %26 = tpu.matmul %22, %25, %cst_16 {dimension_numbers = #tpu.dot_dimension_numbers<[1], [0], [0], [1], [0, 0, 1, 1], [], []>} : vector<32x32xf32>, vector<32x16xf32>, vector<32x16xf32> -> vector<32x16xf32>
    %27 = arith.addf %24, %26 : vector<32x16xf32>
    %c0_17 = arith.constant 0 : index
    %c0_18 = arith.constant 0 : index
    %28 = vector.load %arg6[%c0_17, %c0_18] : memref<1x16xf32, #tpu.memory_space<vmem>>, vector<1x16xf32>
    %29 = vector.broadcast %28 : vector<1x16xf32> to vector<32x16xf32>
    %30 = arith.addf %27, %29 : vector<32x16xf32>
    %31 = math.tanh %30 : vector<32x16xf32>
    %32 = vector.shape_cast %31 : vector<32x16xf32> to vector<8x4x16xf32>
    %c0_19 = arith.constant 0 : index
    %c0_20 = arith.constant 0 : index
    %c0_21 = arith.constant 0 : index
    %33 = vector.load %arg7[%c0_19, %c0_20, %c0_21] : memref<8x4x16xf32, #tpu.memory_space<vmem>>, vector<8x4x16xf32>
    tpu.vector_store %arg7[%c0_19, %c0_20, %c0_21], %32 {strides = array<i32>} : memref<8x4x16xf32, #tpu.memory_space<vmem>>, vector<8x4x16xf32>,
    return
  }
  func.func @transform_0(%arg0: i32) -> (i32, i32, i32) {
    %c0_i32 = arith.constant 0 : i32
    %c0_i32_0 = arith.constant 0 : i32
    %c0_i32_1 = arith.constant 0 : i32
    return %c0_i32, %arg0, %c0_i32_0 : i32, i32, i32
  }
  func.func @transform_1(%arg0: i32) -> (i32, i32, i32) {
    %c0_i32 = arith.constant 0 : i32
    %c0_i32_0 = arith.constant 0 : i32
    %c0_i32_1 = arith.constant 0 : i32
    return %c0_i32, %arg0, %c0_i32_0 : i32, i32, i32
  }
  func.func @transform_2(%arg0: i32) -> (i32, i32) {
    %c0_i32 = arith.constant 0 : i32
    %c0_i32_0 = arith.constant 0 : i32
    %c0_i32_1 = arith.constant 0 : i32
    return %c0_i32, %c0_i32_0 : i32, i32
  }
  func.func @transform_3(%arg0: i32) -> (i32, i32) {
    %c0_i32 = arith.constant 0 : i32
    %c0_i32_0 = arith.constant 0 : i32
    %c0_i32_1 = arith.constant 0 : i32
    return %c0_i32, %c0_i32_0 : i32, i32
  }
  func.func @transform_4(%arg0: i32) -> (i32, i32) {
    %c0_i32 = arith.constant 0 : i32
    %c0_i32_0 = arith.constant 0 : i32
    %c0_i32_1 = arith.constant 0 : i32
    return %c0_i32, %c0_i32_0 : i32, i32
  }
  func.func @transform_5(%arg0: i32) -> (i32, i32) {
    %c0_i32 = arith.constant 0 : i32
    %c0_i32_0 = arith.constant 0 : i32
    %c0_i32_1 = arith.constant 0 : i32
    return %c0_i32, %c0_i32_0 : i32, i32
  }
  func.func @transform_6(%arg0: i32) -> (i32, i32, i32) {
    %c0_i32 = arith.constant 0 : i32
    %c0_i32_0 = arith.constant 0 : i32
    %c0_i32_1 = arith.constant 0 : i32
    return %c0_i32, %arg0, %c0_i32_0 : i32, i32, i32
  }
}

</mosaic_0001>

<llo_original>
// kernel: tpu_custom_call.1
$region0: #{tpu_custom_call.1}
  #allocation0 [shape = 'u32[]', space=smem, size = 0x4, offset = 0x4, fixed_abs, tag = 'smem constant byte address 0x4 - core index']
  #allocation1 [shape = 'u32[144,128]{1,0:T(1,128)}', space=vmem, size = 0x12000, scoped, tag = 'internal scratch']
  %s0 = inlined_call_operand.vmem [shape: f32[8,4,32], index: 0, kind: input, shape index: {}]
  %s1 = inlined_call_operand.vmem [shape: f32[12,4,32], index: 1, kind: input, shape index: {}]
  %s2 = inlined_call_operand.hbm [shape: f32[32,32], index: 2, kind: input, shape index: {}]
  %s3 = inlined_call_operand.vmem [shape: f32[32,16], index: 3, kind: input, shape index: {}]
  %s4 = inlined_call_operand.vmem [shape: f32[32,16], index: 4, kind: input, shape index: {}]
  %s5 = inlined_call_operand.vmem [shape: f32[1,16], index: 5, kind: input, shape index: {}]
  %s6 = inlined_call_operand.hbm [shape: f32[8,4,16], index: 6, kind: output, shape index: {}]
  %s7 = sld [smem:[#allocation0]]
  $region38: #{tpu_custom_call.1} parent=0
    _
  %s9 = ssub.s32 1, %s7
  %s10 = scalar_select 0, %s9, %s7
  $region1: #{tpu_custom_call.1} parent=0
    #allocation2 [shape = 'u8[16384]{0}', space=vmem, size = 0x4000, scoped, tag = 'input window, operand 2, single buffered']
    #allocation3 [shape = 's32[1]{0}', space=sflag, size = 0x4, scoped, tag = 'scoped memory for tpu_custom_call.1']
    #allocation4 [shape = 's32[1]{0}', space=sflag, size = 0x4, scoped, tag = 'scoped memory for tpu_custom_call.1']
    #allocation5 [shape = 'u8[16384]{0}', space=vmem, size = 0x4000, scoped, tag = 'output window, operand 0, single buffered']
    %11 = vsyncpa [#allocation3], 0
    %12 = vsyncpa [#allocation4], 0
    // Predicated region
    $region2: #{tpu_custom_call.1} parent=1 // pred_check
      _
    $region3: #{tpu_custom_call.1} parent=1 // pred_check_branch
      %14 = sbr.rel (0) target = $region5
    $region4: #{tpu_custom_call.1} parent=1 // pred_region
      _
    $region5: #{tpu_custom_call.1} parent=1 // pred_fallthru
      _
    // Predicated region
    $region6: #{tpu_custom_call.1} parent=1 // pred_check
      _
    $region7: #{tpu_custom_call.1} parent=1 // pred_check_branch
      %16 = sbr.rel (0) target = $region9
    $region8: #{tpu_custom_call.1} parent=1 // pred_region
      _
    $region9: #{tpu_custom_call.1} parent=1 // pred_fallthru
      _
    // Predicated region
    $region10: #{tpu_custom_call.1} parent=1 // pred_check
      _
    $region11: #{tpu_custom_call.1} parent=1 // pred_check_branch
      %18 = sbr.rel (0) target = $region13
    $region12: #{tpu_custom_call.1} parent=1 // pred_region
      %s20 = ssub.s32 512, 512
      %21 = vsyncadd [#allocation3], %s20
      %s22 = sshll.u32 [#allocation2], 4
      %s23 = int_to_ptr.vmem [resolvable:$true] %s22
      %28 = dma.hbm_to_vmem [thread:$0]  %s2, 512, %s23, [#allocation3], 128, 128, 8
    $region13: #{tpu_custom_call.1} parent=1 // pred_fallthru
      _
    // Predicated region
    $region14: #{tpu_custom_call.1} parent=1 // pred_check
      _
    $region15: #{tpu_custom_call.1} parent=1 // pred_check_branch
      %30 = sbr.rel (0) target = $region17
    $region16: #{tpu_custom_call.1} parent=1 // pred_region
      _
    $region17: #{tpu_custom_call.1} parent=1 // pred_fallthru
      _
    // Predicated region
    $region18: #{tpu_custom_call.1} parent=1 // pred_check
      _
    $region19: #{tpu_custom_call.1} parent=1 // pred_check_branch
      %32 = sbr.rel (0) target = $region21
    $region20: #{tpu_custom_call.1} parent=1 // pred_region
      _
    $region21: #{tpu_custom_call.1} parent=1 // pred_fallthru
      _
    // Predicated region
    $region22: #{tpu_custom_call.1} parent=1 // pred_check
      _
    $region23: #{tpu_custom_call.1} parent=1 // pred_check_branch
      %34 = sbr.rel (0) target = $region25
    $region24: #{tpu_custom_call.1} parent=1 // pred_region
      _
    $region25: #{tpu_custom_call.1} parent=1 // pred_fallthru
      _
    // Predicated region
    $region26: #{tpu_custom_call.1} parent=1 // pred_check
      _
    $region27: #{tpu_custom_call.1} parent=1 // pred_check_branch
      %36 = sbr.rel (0) target = $region29
    $region28: #{tpu_custom_call.1} parent=1 // pred_region
      %37 = dma.done [#allocation3], 512
    $region29: #{tpu_custom_call.1} parent=1 // pred_fallthru
      _
    %v38 = vld [vmem:[%s0] sm:$0xf]
    %v39 = vld [vmem:[%s0 + $0x4] sm:$0xf]
    %v40 = vld [vmem:[%s0 + $0x8] sm:$0xf]
    %v41 = vld [vmem:[%s0 + $0xc] sm:$0xf]
    %v42 = vld [vmem:[%s0 + $0x10] sm:$0xf]
    %v43 = vld [vmem:[%s0 + $0x14] sm:$0xf]
    %v44 = vld [vmem:[%s0 + $0x18] sm:$0xf]
    %v45 = vld [vmem:[%s0 + $0x1c] sm:$0xf]
    %v46 = vld [vmem:[%s1] sm:$0xf]
    %v47 = vld [vmem:[%s1 + $0x4] sm:$0xf]
    %v48 = vld [vmem:[%s1 + $0x8] sm:$0xf]
    %v49 = vld [vmem:[%s1 + $0xc] sm:$0xf]
    %v50 = vld [vmem:[%s1 + $0x10] sm:$0xf]
    %v51 = vld [vmem:[%s1 + $0x14] sm:$0xf]
    %v52 = vld [vmem:[%s1 + $0x18] sm:$0xf]
    %v53 = vld [vmem:[%s1 + $0x1c] sm:$0xf]
    %v54 = vld [vmem:[%s1 + $0x20] sm:$0xf]
    %v55 = vld [vmem:[%s1 + $0x24] sm:$0xf]
    %v56 = vld [vmem:[%s1 + $0x28] sm:$0xf]
    %v57 = vld [vmem:[%s1 + $0x2c] sm:$0xf]
    %v58 = vld [vmem:[#allocation2] sm:$0xff]
    %v59 = vld [vmem:[#allocation2 + $0x8] sm:$0xff]
    %v60 = vld [vmem:[#allocation2 + $0x10] sm:$0xff]
    %v61 = vld [vmem:[#allocation2 + $0x18] sm:$0xff]
    %v70 = vcombine.low %v38, %v39
    %v71 = vcombine.low %v40, %v41
    %v72 = vcombine.low %v42, %v43
    %v73 = vcombine.low %v44, %v45
    %vm74 = vcmask 261120
    %v75 = vsel %vm74, %v70, 0
    %v77 = vsel %vm74, %v71, 0
    %v79 = vsel %vm74, %v72, 0
    %v81 = vsel %vm74, %v73, 0
    %83 = vmatprep.subr.mxu0 0.0
    %84 = vmatpush1.msra.mxu0 %v58
    %85 = vmatprep.subr.mxu0 0.0
    %86 = vmatpush1.msra.mxu0 %v59
    %87 = vmatprep.subr.mxu0 0.0
    %88 = vmatpush1.msra.mxu0 %v60
    %89 = vmatprep.subr.mxu0 0.0
    %90 = vmatpush1.msra.mxu0 %v61
    %91 = vmatprep.subr.mxu0 0.0
    %92 = vmatpush1.msra.mxu0 0.0
    %93 = vmatprep.subr.mxu0 0.0
    %94 = vmatpush1.msra.mxu0 0.0
    %95 = vmatprep.subr.mxu0 0.0
    %96 = vmatpush1.msra.mxu0 0.0
    %97 = vmatprep.subr.mxu0 0.0
    %98 = vmatpush1.msra.mxu0 0.0
    %99 = vmatprep.subr.mxu0 0.0
    %100 = vmatpush1.msra.mxu0 0.0
    %101 = vmatprep.subr.mxu0 0.0
    %102 = vmatpush1.msra.mxu0 0.0
    %103 = vmatprep.subr.mxu0 0.0
    %104 = vmatpush1.msra.mxu0 0.0
    %105 = vmatprep.subr.mxu0 0.0
    %106 = vmatpush1.msra.mxu0 0.0
    %107 = vmatprep.subr.mxu0 0.0
    %108 = vmatpush1.msra.mxu0 0.0
    %109 = vmatprep.subr.mxu0 0.0
    %110 = vmatpush1.msra.mxu0 0.0
    %111 = vmatprep.subr.mxu0 0.0
    %112 = vmatpush1.msra.mxu0 0.0
    %113 = vmatprep.subr.mxu0 0.0
    %114 = vmatpush1.msra.mxu0 0.0
    %115 = vmatprep.subr.mxu0 0.0
    %116 = vmatpush1.msra.mxu0 0.0
    %117 = vmatprep.subr.mxu0 0.0
    %118 = vmatpush1.msra.mxu0 0.0
    %119 = vmatprep.subr.mxu0 0.0
    %120 = vmatpush1.msra.mxu0 0.0
    %121 = vmatprep.subr.mxu0 0.0
    %122 = vmatpush1.msra.mxu0 0.0
    %123 = vmatprep.subr.mxu0 0.0
    %124 = vmatpush1.msra.mxu0 0.0
    %125 = vmatprep.subr.mxu0 0.0
    %126 = vmatpush1.msra.mxu0 0.0
    %127 = vmatprep.subr.mxu0 0.0
    %128 = vmatpush1.msra.mxu0 0.0
    %129 = vmatprep.subr.mxu0 0.0
    %130 = vmatpush1.msra.mxu0 0.0
    %131 = vmatprep.subr.mxu0 0.0
    %132 = vmatpush1.msra.mxu0 0.0
    %133 = vmatprep.subr.mxu0 0.0
    %134 = vmatpush1.msra.mxu0 0.0
    %135 = vmatprep.subr.mxu0 0.0
    %136 = vmatpush1.msra.mxu0 0.0
    %137 = vmatprep.subr.mxu0 0.0
    %138 = vmatpush1.msra.mxu0 0.0
    %139 = vmatprep.subr.mxu0 0.0
    %140 = vmatpush1.msra.mxu0 0.0
    %141 = vmatprep.subr.mxu0 0.0
    %142 = vmatpush1.msra.mxu0 0.0
    %143 = vmatprep.subr.mxu0 0.0
    %144 = vmatpush1.msra.mxu0 0.0
    %145 = vmatprep.subr.mxu0 0.0
    %146 = vmatpush1.msra.mxu0 0.0
    %147 = vmatprep.mubr.f32.mxu0 0.0
    %148 = vmatmul.mubr.f32.gmra.mrb[0].mxu0 %v75
    %v149 = vpop.f32.mrb[0].mxu0
    %v150 = vadd.f32 0.0, %v149
    %v151 = vpop.f32.mrb[0].mxu0
    %152 = vmatprep.mubr.f32.mxu0 0.0
    %153 = vmatmul.mubr.f32.gmra.mrb[0].mxu0 %v77
    %v154 = vpop.f32.mrb[0].mxu0
    %v155 = vadd.f32 0.0, %v154
    %v156 = vpop.f32.mrb[0].mxu0
    %157 = vmatprep.mubr.f32.mxu0 0.0
    %158 = vmatmul.mubr.f32.gmra.mrb[0].mxu0 %v79
    %v159 = vpop.f32.mrb[0].mxu0
    %v160 = vadd.f32 0.0, %v159
    %v161 = vpop.f32.mrb[0].mxu0
    %162 = vmatprep.mubr.f32.mxu0 0.0
    %163 = vmatmul.mubr.f32.gmra.mrb[0].mxu0 %v81
    %v164 = vpop.f32.mrb[0].mxu0
    %v165 = vadd.f32 0.0, %v164
    %v166 = vpop.f32.mrb[0].mxu0
    %167 = vdwg.mxu0
    %v172 = vcombine.high %v150, %v150
    %v173 = vcombine.high %v155, %v155
    %v174 = vcombine.high %v160, %v160
    %v175 = vcombine.high %v165, %v165
    %v180 = vcombine.low %v150, %v155
    %v182 = vunpack.c.l.s4 1983009808
    %v183 = vunpack.c.0.s8 %v182
    %v184 = vlaneseq
    %v185 = vshrl.u32 %v184, 7
    %v186 = vsub.s32 %v183, %v185
    %v187 = vrot.slane %v180, %v186
    %v188 = vcombine.low %v172, %v173
    %v190 = vunpack.c.l.s4 1983009808
    %v191 = vunpack.c.0.s8 %v190
    %v192 = vlaneseq
    %v193 = vshrl.u32 %v192, 7
    %v194 = vsub.s32 %v191, %v193
    %v195 = vrot.slane %v188, %v194
    %v196 = vcombine.low %v187, %v195
    %v197 = vcombine.high %v187, %v195
    %v199 = vunpack.c.l.s4 1934713408
    %v200 = vunpack.c.0.s8 %v199
    %v201 = vlaneseq
    %v202 = vshrl.u32 %v201, 7
    %v203 = vsub.s32 %v200, %v202
    %v204 = vrot.slane %v196, %v203
    %v206 = vunpack.c.l.s4 1934713408
    %v207 = vunpack.c.0.s8 %v206
    %v208 = vlaneseq
    %v209 = vshrl.u32 %v208, 7
    %v210 = vsub.s32 %v207, %v209
    %v211 = vrot.slane %v197, %v210
    %v212 = vcombine.high %v204, 0.0
    %v213 = vcombine.high %v211, 0.0
    %v214 = vcombine.low %v160, %v165
    %v216 = vunpack.c.l.s4 1983009808
    %v217 = vunpack.c.0.s8 %v216
    %v218 = vlaneseq
    %v219 = vshrl.u32 %v218, 7
    %v220 = vsub.s32 %v217, %v219
    %v221 = vrot.slane %v214, %v220
    %v222 = vcombine.low %v174, %v175
    %v224 = vunpack.c.l.s4 1983009808
    %v225 = vunpack.c.0.s8 %v224
    %v226 = vlaneseq
    %v227 = vshrl.u32 %v226, 7
    %v228 = vsub.s32 %v225, %v227
    %v229 = vrot.slane %v222, %v228
    %v230 = vcombine.low %v221, %v229
    %v231 = vcombine.high %v221, %v229
    %v233 = vunpack.c.l.s4 1934713408
    %v234 = vunpack.c.0.s8 %v233
    %v235 = vlaneseq
    %v236 = vshrl.u32 %v235, 7
    %v237 = vsub.s32 %v234, %v236
    %v238 = vrot.slane %v230, %v237
    %v240 = vunpack.c.l.s4 1934713408
    %v241 = vunpack.c.0.s8 %v240
    %v242 = vlaneseq
    %v243 = vshrl.u32 %v242, 7
    %v244 = vsub.s32 %v241, %v243
    %v245 = vrot.slane %v231, %v244
    %v246 = vcombine.high %v238, 0.0
    %v247 = vcombine.high %v245, 0.0
    %v248 = vcombine.low %v46, %v48
    %v250 = vunpack.c.l.s4 1983009808
    %v251 = vunpack.c.0.s8 %v250
    %v252 = vlaneseq
    %v253 = vshrl.u32 %v252, 7
    %v254 = vsub.s32 %v251, %v253
    %v255 = vrot.slane %v248, %v254
    %v256 = vcombine.low %v47, %v49
    %v258 = vunpack.c.l.s4 1983009808
    %v259 = vunpack.c.0.s8 %v258
    %v260 = vlaneseq
    %v261 = vshrl.u32 %v260, 7
    %v262 = vsub.s32 %v259, %v261
    %v263 = vrot.slane %v256, %v262
    %v264 = vcombine.low %v50, %v52
    %v266 = vunpack.c.l.s4 1983009808
    %v267 = vunpack.c.0.s8 %v266
    %v268 = vlaneseq
    %v269 = vshrl.u32 %v268, 7
    %v270 = vsub.s32 %v267, %v269
    %v271 = vrot.slane %v264, %v270
    %v272 = vcombine.low %v51, %v53
    %v274 = vunpack.c.l.s4 1983009808
    %v275 = vunpack.c.0.s8 %v274
    %v276 = vlaneseq
    %v277 = vshrl.u32 %v276, 7
    %v278 = vsub.s32 %v275, %v277
    %v279 = vrot.slane %v272, %v278
    %v280 = vcombine.low %v255, %v263
    %v281 = vcombine.high %v255, %v263
    %v283 = vunpack.c.l.s4 1934713408
    %v284 = vunpack.c.0.s8 %v283
    %v285 = vlaneseq
    %v286 = vshrl.u32 %v285, 7
    %v287 = vsub.s32 %v284, %v286
    %v288 = vrot.slane %v280, %v287
    %v290 = vunpack.c.l.s4 1934713408
    %v291 = vunpack.c.0.s8 %v290
    %v292 = vlaneseq
    %v293 = vshrl.u32 %v292, 7
    %v294 = vsub.s32 %v291, %v293
    %v295 = vrot.slane %v281, %v294
    %v296 = vcombine.low %v271, %v279
    %v297 = vcombine.high %v271, %v279
    %v299 = vunpack.c.l.s4 1934713408
    %v300 = vunpack.c.0.s8 %v299
    %v301 = vlaneseq
    %v302 = vshrl.u32 %v301, 7
    %v303 = vsub.s32 %v300, %v302
    %v304 = vrot.slane %v296, %v303
    %v306 = vunpack.c.l.s4 1934713408
    %v307 = vunpack.c.0.s8 %v306
    %v308 = vlaneseq
    %v309 = vshrl.u32 %v308, 7
    %v310 = vsub.s32 %v307, %v309
    %v311 = vrot.slane %v297, %v310
    %v312 = vcombine.low %v288, %v304
    %v313 = vcombine.high %v288, %v304
    %v314 = vcombine.low %v295, %v311
    %v315 = vcombine.high %v295, %v311
    %v316 = vcombine.low %v54, %v56
    %v318 = vunpack.c.l.s4 1983009808
    %v319 = vunpack.c.0.s8 %v318
    %v320 = vlaneseq
    %v321 = vshrl.u32 %v320, 7
    %v322 = vsub.s32 %v319, %v321
    %v323 = vrot.slane %v316, %v322
    %v324 = vcombine.low %v55, %v57
    %v326 = vunpack.c.l.s4 1983009808
    %v327 = vunpack.c.0.s8 %v326
    %v328 = vlaneseq
    %v329 = vshrl.u32 %v328, 7
    %v330 = vsub.s32 %v327, %v329
    %v331 = vrot.slane %v324, %v330
    %v332 = vcombine.low %v323, %v331
    %v333 = vcombine.high %v323, %v331
    %v335 = vunpack.c.l.s4 1934713408
    %v336 = vunpack.c.0.s8 %v335
    %v337 = vlaneseq
    %v338 = vshrl.u32 %v337, 7
    %v339 = vsub.s32 %v336, %v338
    %v340 = vrot.slane %v332, %v339
    %v342 = vunpack.c.l.s4 1934713408
    %v343 = vunpack.c.0.s8 %v342
    %v344 = vlaneseq
    %v345 = vshrl.u32 %v344, 7
    %v346 = vsub.s32 %v343, %v345
    %v347 = vrot.slane %v333, %v346
    %v348 = vcombine.high %v340, 0.0
    %v349 = vcombine.high %v347, 0.0
    %v352 = vcombine.low %v204, %v238
    %v353 = vsel %vm74, %v352, 0
    %v356 = vsel %vm74, %v312, 0
    %v359 = vsel %vm74, %v340, 0
    %361 = vmatprep.subr.mxu0 0.0
    %362 = vmatpush1.xpose.msra.mxu0 %v356
    %363 = vmatprep.subr.mxu0 0.0
    %364 = vmatpush1.xpose.msra.mxu0 %v359
    %365 = vmatprep.subr.mxu0 0.0
    %366 = vmatpush1.xpose.msra.mxu0 0.0
    %367 = vmatprep.subr.mxu0 0.0
    %368 = vmatpush1.xpose.msra.mxu0 0.0
    %369 = vmatprep.subr.mxu0 0.0
    %370 = vmatpush1.xpose.msra.mxu0 0.0
    %371 = vmatprep.subr.mxu0 0.0
    %372 = vmatpush1.xpose.msra.mxu0 0.0
    %373 = vmatprep.subr.mxu0 0.0
    %374 = vmatpush1.xpose.msra.mxu0 0.0
    %375 = vmatprep.subr.mxu0 0.0
    %376 = vmatpush1.xpose.msra.mxu0 0.0
    %377 = vmatprep.subr.mxu0 0.0
    %378 = vmatpush1.xpose.msra.mxu0 0.0
    %379 = vmatprep.subr.mxu0 0.0
    %380 = vmatpush1.xpose.msra.mxu0 0.0
    %381 = vmatprep.subr.mxu0 0.0
    %382 = vmatpush1.xpose.msra.mxu0 0.0
    %383 = vmatprep.subr.mxu0 0.0
    %384 = vmatpush1.xpose.msra.mxu0 0.0
    %385 = vmatprep.subr.mxu0 0.0
    %386 = vmatpush1.xpose.msra.mxu0 0.0
    %387 = vmatprep.subr.mxu0 0.0
    %388 = vmatpush1.xpose.msra.mxu0 0.0
    %389 = vmatprep.subr.mxu0 0.0
    %390 = vmatpush1.xpose.msra.mxu0 0.0
    %391 = vmatprep.subr.mxu0 0.0
    %392 = vmatpush1.xpose.msra.mxu0 0.0
    %393 = vmatprep.subr.mxu0 0.0
    %394 = vmatpush1.xpose.msra.mxu0 0.0
    %395 = vmatprep.subr.mxu0 0.0
    %396 = vmatpush1.xpose.msra.mxu0 0.0
    %397 = vmatprep.subr.mxu0 0.0
    %398 = vmatpush1.xpose.msra.mxu0 0.0
    %399 = vmatprep.subr.mxu0 0.0
    %400 = vmatpush1.xpose.msra.mxu0 0.0
    %401 = vmatprep.subr.mxu0 0.0
    %402 = vmatpush1.xpose.msra.mxu0 0.0
    %403 = vmatprep.subr.mxu0 0.0
    %404 = vmatpush1.xpose.msra.mxu0 0.0
    %405 = vmatprep.subr.mxu0 0.0
    %406 = vmatpush1.xpose.msra.mxu0 0.0
    %407 = vmatprep.subr.mxu0 0.0
    %408 = vmatpush1.xpose.msra.mxu0 0.0
    %409 = vmatprep.subr.mxu0 0.0
    %410 = vmatpush1.xpose.msra.mxu0 0.0
    %411 = vmatprep.subr.mxu0 0.0
    %412 = vmatpush1.xpose.msra.mxu0 0.0
    %413 = vmatprep.subr.mxu0 0.0
    %414 = vmatpush1.xpose.msra.mxu0 0.0
    %415 = vmatprep.subr.mxu0 0.0
    %416 = vmatpush1.xpose.msra.mxu0 0.0
    %417 = vmatprep.subr.mxu0 0.0
    %418 = vmatpush1.xpose.msra.mxu0 0.0
    %419 = vmatprep.subr.mxu0 0.0
    %420 = vmatpush1.xpose.msra.mxu0 0.0
    %421 = vmatprep.subr.mxu0 0.0
    %422 = vmatpush1.xpose.msra.mxu0 0.0
    %423 = vmatprep.subr.mxu0 0.0
    %424 = vmatpush1.xpose.msra.mxu0 0.0
    %425 = vmatprep.mubr.f32.mxu0 0.0
    %426 = vmatmul.mubr.f32.gmra.mrb[0].mxu0 %v353
    %v427 = vpop.f32.mrb[0].mxu0
    %v428 = vadd.f32 0.0, %v427
    %v429 = vpop.f32.mrb[0].mxu0
    %430 = vdwg.mxu0
    %v433 = vcombine.low %v212, %v246
    %v434 = vsel %vm74, %v433, 0
    %v437 = vsel %vm74, %v313, 0
    %v440 = vsel %vm74, %v348, 0
    %442 = vmatprep.subr.mxu0 0.0
    %443 = vmatpush1.xpose.msra.mxu0 %v437
    %444 = vmatprep.subr.mxu0 0.0
    %445 = vmatpush1.xpose.msra.mxu0 %v440
    %446 = vmatprep.subr.mxu0 0.0
    %447 = vmatpush1.xpose.msra.mxu0 0.0
    %448 = vmatprep.subr.mxu0 0.0
    %449 = vmatpush1.xpose.msra.mxu0 0.0
    %450 = vmatprep.subr.mxu0 0.0
    %451 = vmatpush1.xpose.msra.mxu0 0.0
    %452 = vmatprep.subr.mxu0 0.0
    %453 = vmatpush1.xpose.msra.mxu0 0.0
    %454 = vmatprep.subr.mxu0 0.0
    %455 = vmatpush1.xpose.msra.mxu0 0.0
    %456 = vmatprep.subr.mxu0 0.0
    %457 = vmatpush1.xpose.msra.mxu0 0.0
    %458 = vmatprep.subr.mxu0 0.0
    %459 = vmatpush1.xpose.msra.mxu0 0.0
    %460 = vmatprep.subr.mxu0 0.0
    %461 = vmatpush1.xpose.msra.mxu0 0.0
    %462 = vmatprep.subr.mxu0 0.0
    %463 = vmatpush1.xpose.msra.mxu0 0.0
    %464 = vmatprep.subr.mxu0 0.0
    %465 = vmatpush1.xpose.msra.mxu0 0.0
    %466 = vmatprep.subr.mxu0 0.0
    %467 = vmatpush1.xpose.msra.mxu0 0.0
    %468 = vmatprep.subr.mxu0 0.0
    %469 = vmatpush1.xpose.msra.mxu0 0.0
    %470 = vmatprep.subr.mxu0 0.0
    %471 = vmatpush1.xpose.msra.mxu0 0.0
    %472 = vmatprep.subr.mxu0 0.0
    %473 = vmatpush1.xpose.msra.mxu0 0.0
    %474 = vmatprep.subr.mxu0 0.0
    %475 = vmatpush1.xpose.msra.mxu0 0.0
    %476 = vmatprep.subr.mxu0 0.0
    %477 = vmatpush1.xpose.msra.mxu0 0.0
    %478 = vmatprep.subr.mxu0 0.0
    %479 = vmatpush1.xpose.msra.mxu0 0.0
    %480 = vmatprep.subr.mxu0 0.0
    %481 = vmatpush1.xpose.msra.mxu0 0.0
    %482 = vmatprep.subr.mxu0 0.0
    %483 = vmatpush1.xpose.msra.mxu0 0.0
    %484 = vmatprep.subr.mxu0 0.0
    %485 = vmatpush1.xpose.msra.mxu0 0.0
    %486 = vmatprep.subr.mxu0 0.0
    %487 = vmatpush1.xpose.msra.mxu0 0.0
    %488 = vmatprep.subr.mxu0 0.0
    %489 = vmatpush1.xpose.msra.mxu0 0.0
    %490 = vmatprep.subr.mxu0 0.0
    %491 = vmatpush1.xpose.msra.mxu0 0.0
    %492 = vmatprep.subr.mxu0 0.0
    %493 = vmatpush1.xpose.msra.mxu0 0.0
    %494 = vmatprep.subr.mxu0 0.0
    %495 = vmatpush1.xpose.msra.mxu0 0.0
    %496 = vmatprep.subr.mxu0 0.0
    %497 = vmatpush1.xpose.msra.mxu0 0.0
    %498 = vmatprep.subr.mxu0 0.0
    %499 = vmatpush1.xpose.msra.mxu0 0.0
    %500 = vmatprep.subr.mxu0 0.0
    %501 = vmatpush1.xpose.msra.mxu0 0.0
    %502 = vmatprep.subr.mxu0 0.0
    %503 = vmatpush1.xpose.msra.mxu0 0.0
    %504 = vmatprep.subr.mxu0 0.0
    %505 = vmatpush1.xpose.msra.mxu0 0.0
    %506 = vmatprep.mubr.f32.mxu0 0.0
    %507 = vmatmul.mubr.f32.gmra.mrb[0].mxu0 %v434
    %v508 = vpop.f32.mrb[0].mxu0
    %v509 = vadd.f32 0.0, %v508
    %v510 = vpop.f32.mrb[0].mxu0
    %511 = vdwg.mxu0
    %v514 = vcombine.low %v211, %v245
    %v515 = vsel %vm74, %v514, 0
    %v518 = vsel %vm74, %v314, 0
    %v521 = vsel %vm74, %v347, 0
    %523 = vmatprep.subr.mxu0 0.0
    %524 = vmatpush1.xpose.msra.mxu0 %v518
    %525 = vmatprep.subr.mxu0 0.0
    %526 = vmatpush1.xpose.msra.mxu0 %v521
    %527 = vmatprep.subr.mxu0 0.0
    %528 = vmatpush1.xpose.msra.mxu0 0.0
    %529 = vmatprep.subr.mxu0 0.0
    %530 = vmatpush1.xpose.msra.mxu0 0.0
    %531 = vmatprep.subr.mxu0 0.0
    %532 = vmatpush1.xpose.msra.mxu0 0.0
    %533 = vmatprep.subr.mxu0 0.0
    %534 = vmatpush1.xpose.msra.mxu0 0.0
    %535 = vmatprep.subr.mxu0 0.0
    %536 = vmatpush1.xpose.msra.mxu0 0.0
    %537 = vmatprep.subr.mxu0 0.0
    %538 = vmatpush1.xpose.msra.mxu0 0.0
    %539 = vmatprep.subr.mxu0 0.0
    %540 = vmatpush1.xpose.msra.mxu0 0.0
    %541 = vmatprep.subr.mxu0 0.0
    %542 = vmatpush1.xpose.msra.mxu0 0.0
    %543 = vmatprep.subr.mxu0 0.0
    %544 = vmatpush1.xpose.msra.mxu0 0.0
    %545 = vmatprep.subr.mxu0 0.0
    %546 = vmatpush1.xpose.msra.mxu0 0.0
    %547 = vmatprep.subr.mxu0 0.0
    %548 = vmatpush1.xpose.msra.mxu0 0.0
    %549 = vmatprep.subr.mxu0 0.0
    %550 = vmatpush1.xpose.msra.mxu0 0.0
    %551 = vmatprep.subr.mxu0 0.0
    %552 = vmatpush1.xpose.msra.mxu0 0.0
    %553 = vmatprep.subr.mxu0 0.0
    %554 = vmatpush1.xpose.msra.mxu0 0.0
    %555 = vmatprep.subr.mxu0 0.0
    %556 = vmatpush1.xpose.msra.mxu0 0.0
    %557 = vmatprep.subr.mxu0 0.0
    %558 = vmatpush1.xpose.msra.mxu0 0.0
    %559 = vmatprep.subr.mxu0 0.0
    %560 = vmatpush1.xpose.msra.mxu0 0.0
    %561 = vmatprep.subr.mxu0 0.0
    %562 = vmatpush1.xpose.msra.mxu0 0.0
    %563 = vmatprep.subr.mxu0 0.0
    %564 = vmatpush1.xpose.msra.mxu0 0.0
    %565 = vmatprep.subr.mxu0 0.0
    %566 = vmatpush1.xpose.msra.mxu0 0.0
    %567 = vmatprep.subr.mxu0 0.0
    %568 = vmatpush1.xpose.msra.mxu0 0.0
    %569 = vmatprep.subr.mxu0 0.0
    %570 = vmatpush1.xpose.msra.mxu0 0.0
    %571 = vmatprep.subr.mxu0 0.0
    %572 = vmatpush1.xpose.msra.mxu0 0.0
    %573 = vmatprep.subr.mxu0 0.0
    %574 = vmatpush1.xpose.msra.mxu0 0.0
    %575 = vmatprep.subr.mxu0 0.0
    %576 = vmatpush1.xpose.msra.mxu0 0.0
    %577 = vmatprep.subr.mxu0 0.0
    %578 = vmatpush1.xpose.msra.mxu0 0.0
    %579 = vmatprep.subr.mxu0 0.0
    %580 = vmatpush1.xpose.msra.mxu0 0.0
    %581 = vmatprep.subr.mxu0 0.0
    %582 = vmatpush1.xpose.msra.mxu0 0.0
    %583 = vmatprep.subr.mxu0 0.0
    %584 = vmatpush1.xpose.msra.mxu0 0.0
    %585 = vmatprep.subr.mxu0 0.0
    %586 = vmatpush1.xpose.msra.mxu0 0.0
    %587 = vmatprep.mubr.f32.mxu0 0.0
    %588 = vmatmul.mubr.f32.gmra.mrb[0].mxu0 %v515
    %v589 = vpop.f32.mrb[0].mxu0
    %v590 = vadd.f32 0.0, %v589
    %v591 = vpop.f32.mrb[0].mxu0
    %592 = vdwg.mxu0
    %v595 = vcombine.low %v213, %v247
    %v596 = vsel %vm74, %v595, 0
    %v599 = vsel %vm74, %v315, 0
    %v602 = vsel %vm74, %v349, 0
    %604 = vmatprep.subr.mxu0 0.0
    %605 = vmatpush1.xpose.msra.mxu0 %v599
    %606 = vmatprep.subr.mxu0 0.0
    %607 = vmatpush1.xpose.msra.mxu0 %v602
    %608 = vmatprep.subr.mxu0 0.0
    %609 = vmatpush1.xpose.msra.mxu0 0.0
    %610 = vmatprep.subr.mxu0 0.0
    %611 = vmatpush1.xpose.msra.mxu0 0.0
    %612 = vmatprep.subr.mxu0 0.0
    %613 = vmatpush1.xpose.msra.mxu0 0.0
    %614 = vmatprep.subr.mxu0 0.0
    %615 = vmatpush1.xpose.msra.mxu0 0.0
    %616 = vmatprep.subr.mxu0 0.0
    %617 = vmatpush1.xpose.msra.mxu0 0.0
    %618 = vmatprep.subr.mxu0 0.0
    %619 = vmatpush1.xpose.msra.mxu0 0.0
    %620 = vmatprep.subr.mxu0 0.0
    %621 = vmatpush1.xpose.msra.mxu0 0.0
    %622 = vmatprep.subr.mxu0 0.0
    %623 = vmatpush1.xpose.msra.mxu0 0.0
    %624 = vmatprep.subr.mxu0 0.0
    %625 = vmatpush1.xpose.msra.mxu0 0.0
    %626 = vmatprep.subr.mxu0 0.0
    %627 = vmatpush1.xpose.msra.mxu0 0.0
    %628 = vmatprep.subr.mxu0 0.0
    %629 = vmatpush1.xpose.msra.mxu0 0.0
    %630 = vmatprep.subr.mxu0 0.0
    %631 = vmatpush1.xpose.msra.mxu0 0.0
    %632 = vmatprep.subr.mxu0 0.0
    %633 = vmatpush1.xpose.msra.mxu0 0.0
    %634 = vmatprep.subr.mxu0 0.0
    %635 = vmatpush1.xpose.msra.mxu0 0.0
    %636 = vmatprep.subr.mxu0 0.0
    %637 = vmatpush1.xpose.msra.mxu0 0.0
    %638 = vmatprep.subr.mxu0 0.0
    %639 = vmatpush1.xpose.msra.mxu0 0.0
    %640 = vmatprep.subr.mxu0 0.0
    %641 = vmatpush1.xpose.msra.mxu0 0.0
    %642 = vmatprep.subr.mxu0 0.0
    %643 = vmatpush1.xpose.msra.mxu0 0.0
    %644 = vmatprep.subr.mxu0 0.0
    %645 = vmatpush1.xpose.msra.mxu0 0.0
    %646 = vmatprep.subr.mxu0 0.0
    %647 = vmatpush1.xpose.msra.mxu0 0.0
    %648 = vmatprep.subr.mxu0 0.0
    %649 = vmatpush1.xpose.msra.mxu0 0.0
    %650 = vmatprep.subr.mxu0 0.0
    %651 = vmatpush1.xpose.msra.mxu0 0.0
    %652 = vmatprep.subr.mxu0 0.0
    %653 = vmatpush1.xpose.msra.mxu0 0.0
    %654 = vmatprep.subr.mxu0 0.0
    %655 = vmatpush1.xpose.msra.mxu0 0.0
    %656 = vmatprep.subr.mxu0 0.0
    %657 = vmatpush1.xpose.msra.mxu0 0.0
    %658 = vmatprep.subr.mxu0 0.0
    %659 = vmatpush1.xpose.msra.mxu0 0.0
    %660 = vmatprep.subr.mxu0 0.0
    %661 = vmatpush1.xpose.msra.mxu0 0.0
    %662 = vmatprep.subr.mxu0 0.0
    %663 = vmatpush1.xpose.msra.mxu0 0.0
    %664 = vmatprep.subr.mxu0 0.0
    %665 = vmatpush1.xpose.msra.mxu0 0.0
    %666 = vmatprep.subr.mxu0 0.0
    %667 = vmatpush1.xpose.msra.mxu0 0.0
    %668 = vmatprep.mubr.f32.mxu0 0.0
    %669 = vmatmul.mubr.f32.gmra.mrb[0].mxu0 %v596
    %v670 = vpop.f32.mrb[0].mxu0
    %v671 = vadd.f32 0.0, %v670
    %v672 = vpop.f32.mrb[0].mxu0
    %673 = vdwg.mxu0
    %vm674 = vcmask 97280
    %v675 = vsel %vm674, %v428, -inf
    %676 = vmax.xlane.f32.xlu0 %v675
    %v677 = vpop.xlane.xlu0 %676
    %v678 = vsel %vm674, %v509, -inf
    %679 = vmax.xlane.f32.xlu0 %v678
    %v680 = vpop.xlane.xlu0 %679
    %v681 = vsel %vm674, %v590, -inf
    %682 = vmax.xlane.f32.xlu0 %v681
    %v683 = vpop.xlane.xlu0 %682
    %v684 = vsel %vm674, %v671, -inf
    %685 = vmax.xlane.f32.xlu0 %v684
    %v686 = vpop.xlane.xlu0 %685
    %v687 = vsub.f32 %v428, %v677
    %v688 = vsub.f32 %v509, %v680
    %v689 = vsub.f32 %v590, %v683
    %v690 = vsub.f32 %v671, %v686
    %v691 = vmul.f32 %v687, 1.442695
    %v692 = vpow.pop %v691
    %v693 = vmul.f32 %v688, 1.442695
    %v694 = vpow.pop %v693
    %v695 = vmul.f32 %v689, 1.442695
    %v696 = vpow.pop %v695
    %v697 = vmul.f32 %v690, 1.442695
    %v698 = vpow.pop %v697
    %v699 = vsel %vm674, %v692, 0.0
    %700 = vadd.xlane.f32.xlu0 %v699
    %v701 = vpop.xlane.xlu0 %700
    %v702 = vsel %vm674, %v694, 0.0
    %703 = vadd.xlane.f32.xlu0 %v702
    %v704 = vpop.xlane.xlu0 %703
    %v705 = vsel %vm674, %v696, 0.0
    %706 = vadd.xlane.f32.xlu0 %v705
    %v707 = vpop.xlane.xlu0 %706
    %v708 = vsel %vm674, %v698, 0.0
    %709 = vadd.xlane.f32.xlu0 %v708
    %v710 = vpop.xlane.xlu0 %709
    %v711 = vrcp.pop %v701
    %v712 = vrcp.pop %v704
    %v713 = vrcp.pop %v707
    %v714 = vrcp.pop %v710
    %v715 = vmul.f32 %v692, %v711
    %v716 = vmul.f32 %v694, %v712
    %v717 = vmul.f32 %v696, %v713
    %v718 = vmul.f32 %v698, %v714
    %v720 = vsel %vm674, %v715, 0
    %vm722 = vcmask 1043456
    %v723 = vsel %vm722, %v340, 0
    %725 = vmatprep.subr.mxu0 0.0
    %726 = vmatpush1.msra.mxu0 %v312
    %727 = vmatprep.subr.mxu0 0.0
    %728 = vmatpush1.msra.mxu0 %v723
    %729 = vmatprep.subr.mxu0 0.0
    %730 = vmatpush1.msra.mxu0 0.0
    %731 = vmatprep.subr.mxu0 0.0
    %732 = vmatpush1.msra.mxu0 0.0
    %733 = vmatprep.subr.mxu0 0.0
    %734 = vmatpush1.msra.mxu0 0.0
    %735 = vmatprep.subr.mxu0 0.0
    %736 = vmatpush1.msra.mxu0 0.0
    %737 = vmatprep.subr.mxu0 0.0
    %738 = vmatpush1.msra.mxu0 0.0
    %739 = vmatprep.subr.mxu0 0.0
    %740 = vmatpush1.msra.mxu0 0.0
    %741 = vmatprep.subr.mxu0 0.0
    %742 = vmatpush1.msra.mxu0 0.0
    %743 = vmatprep.subr.mxu0 0.0
    %744 = vmatpush1.msra.mxu0 0.0
    %745 = vmatprep.subr.mxu0 0.0
    %746 = vmatpush1.msra.mxu0 0.0
    %747 = vmatprep.subr.mxu0 0.0
    %748 = vmatpush1.msra.mxu0 0.0
    %749 = vmatprep.subr.mxu0 0.0
    %750 = vmatpush1.msra.mxu0 0.0
    %751 = vmatprep.subr.mxu0 0.0
    %752 = vmatpush1.msra.mxu0 0.0
    %753 = vmatprep.subr.mxu0 0.0
    %754 = vmatpush1.msra.mxu0 0.0
    %755 = vmatprep.subr.mxu0 0.0
    %756 = vmatpush1.msra.mxu0 0.0
    %757 = vmatprep.subr.mxu0 0.0
    %758 = vmatpush1.msra.mxu0 0.0
    %759 = vmatprep.subr.mxu0 0.0
    %760 = vmatpush1.msra.mxu0 0.0
    %761 = vmatprep.subr.mxu0 0.0
    %762 = vmatpush1.msra.mxu0 0.0
    %763 = vmatprep.subr.mxu0 0.0
    %764 = vmatpush1.msra.mxu0 0.0
    %765 = vmatprep.subr.mxu0 0.0
    %766 = vmatpush1.msra.mxu0 0.0
    %767 = vmatprep.subr.mxu0 0.0
    %768 = vmatpush1.msra.mxu0 0.0
    %769 = vmatprep.subr.mxu0 0.0
    %770 = vmatpush1.msra.mxu0 0.0
    %771 = vmatprep.subr.mxu0 0.0
    %772 = vmatpush1.msra.mxu0 0.0
    %773 = vmatprep.subr.mxu0 0.0
    %774 = vmatpush1.msra.mxu0 0.0
    %775 = vmatprep.subr.mxu0 0.0
    %776 = vmatpush1.msra.mxu0 0.0
    %777 = vmatprep.subr.mxu0 0.0
    %778 = vmatpush1.msra.mxu0 0.0
    %779 = vmatprep.subr.mxu0 0.0
    %780 = vmatpush1.msra.mxu0 0.0
    %781 = vmatprep.subr.mxu0 0.0
    %782 = vmatpush1.msra.mxu0 0.0
    %783 = vmatprep.subr.mxu0 0.0
    %784 = vmatpush1.msra.mxu0 0.0
    %785 = vmatprep.subr.mxu0 0.0
    %786 = vmatpush1.msra.mxu0 0.0
    %787 = vmatprep.subr.mxu0 0.0
    %788 = vmatpush1.msra.mxu0 0.0
    %789 = vmatprep.mubr.f32.mxu0 0.0
    %790 = vmatmul.mubr.f32.gmra.mrb[0].mxu0 %v720
    %v791 = vpop.f32.mrb[0].mxu0
    %v792 = vadd.f32 0.0, %v791
    %v793 = vpop.f32.mrb[0].mxu0
    %794 = vdwg.mxu0
    %v796 = vsel %vm674, %v716, 0
    %v798 = vsel %vm722, %v348, 0
    %800 = vmatprep.subr.mxu0 0.0
    %801 = vmatpush1.msra.mxu0 %v313
    %802 = vmatprep.subr.mxu0 0.0
    %803 = vmatpush1.msra.mxu0 %v798
    %804 = vmatprep.subr.mxu0 0.0
    %805 = vmatpush1.msra.mxu0 0.0
    %806 = vmatprep.subr.mxu0 0.0
    %807 = vmatpush1.msra.mxu0 0.0
    %808 = vmatprep.subr.mxu0 0.0
    %809 = vmatpush1.msra.mxu0 0.0
    %810 = vmatprep.subr.mxu0 0.0
    %811 = vmatpush1.msra.mxu0 0.0
    %812 = vmatprep.subr.mxu0 0.0
    %813 = vmatpush1.msra.mxu0 0.0
    %814 = vmatprep.subr.mxu0 0.0
    %815 = vmatpush1.msra.mxu0 0.0
    %816 = vmatprep.subr.mxu0 0.0
    %817 = vmatpush1.msra.mxu0 0.0
    %818 = vmatprep.subr.mxu0 0.0
    %819 = vmatpush1.msra.mxu0 0.0
    %820 = vmatprep.subr.mxu0 0.0
    %821 = vmatpush1.msra.mxu0 0.0
    %822 = vmatprep.subr.mxu0 0.0
    %823 = vmatpush1.msra.mxu0 0.0
    %824 = vmatprep.subr.mxu0 0.0
    %825 = vmatpush1.msra.mxu0 0.0
    %826 = vmatprep.subr.mxu0 0.0
    %827 = vmatpush1.msra.mxu0 0.0
    %828 = vmatprep.subr.mxu0 0.0
    %829 = vmatpush1.msra.mxu0 0.0
    %830 = vmatprep.subr.mxu0 0.0
    %831 = vmatpush1.msra.mxu0 0.0
    %832 = vmatprep.subr.mxu0 0.0
    %833 = vmatpush1.msra.mxu0 0.0
    %834 = vmatprep.subr.mxu0 0.0
    %835 = vmatpush1.msra.mxu0 0.0
    %836 = vmatprep.subr.mxu0 0.0
    %837 = vmatpush1.msra.mxu0 0.0
    %838 = vmatprep.subr.mxu0 0.0
    %839 = vmatpush1.msra.mxu0 0.0
    %840 = vmatprep.subr.mxu0 0.0
    %841 = vmatpush1.msra.mxu0 0.0
    %842 = vmatprep.subr.mxu0 0.0
    %843 = vmatpush1.msra.mxu0 0.0
    %844 = vmatprep.subr.mxu0 0.0
    %845 = vmatpush1.msra.mxu0 0.0
    %846 = vmatprep.subr.mxu0 0.0
    %847 = vmatpush1.msra.mxu0 0.0
    %848 = vmatprep.subr.mxu0 0.0
    %849 = vmatpush1.msra.mxu0 0.0
    %850 = vmatprep.subr.mxu0 0.0
    %851 = vmatpush1.msra.mxu0 0.0
    %852 = vmatprep.subr.mxu0 0.0
    %853 = vmatpush1.msra.mxu0 0.0
    %854 = vmatprep.subr.mxu0 0.0
    %855 = vmatpush1.msra.mxu0 0.0
    %856 = vmatprep.subr.mxu0 0.0
    %857 = vmatpush1.msra.mxu0 0.0
    %858 = vmatprep.subr.mxu0 0.0
    %859 = vmatpush1.msra.mxu0 0.0
    %860 = vmatprep.subr.mxu0 0.0
    %861 = vmatpush1.msra.mxu0 0.0
    %862 = vmatprep.subr.mxu0 0.0
    %863 = vmatpush1.msra.mxu0 0.0
    %864 = vmatprep.mubr.f32.mxu0 0.0
    %865 = vmatmul.mubr.f32.gmra.mrb[0].mxu0 %v796
    %v866 = vpop.f32.mrb[0].mxu0
    %v867 = vadd.f32 0.0, %v866
    %v868 = vpop.f32.mrb[0].mxu0
    %869 = vdwg.mxu0
    %v871 = vsel %vm674, %v717, 0
    %v873 = vsel %vm722, %v347, 0
    %875 = vmatprep.subr.mxu0 0.0
    %876 = vmatpush1.msra.mxu0 %v314
    %877 = vmatprep.subr.mxu0 0.0
    %878 = vmatpush1.msra.mxu0 %v873
    %879 = vmatprep.subr.mxu0 0.0
    %880 = vmatpush1.msra.mxu0 0.0
    %881 = vmatprep.subr.mxu0 0.0
    %882 = vmatpush1.msra.mxu0 0.0
    %883 = vmatprep.subr.mxu0 0.0
    %884 = vmatpush1.msra.mxu0 0.0
    %885 = vmatprep.subr.mxu0 0.0
    %886 = vmatpush1.msra.mxu0 0.0
    %887 = vmatprep.subr.mxu0 0.0
    %888 = vmatpush1.msra.mxu0 0.0
    %889 = vmatprep.subr.mxu0 0.0
    %890 = vmatpush1.msra.mxu0 0.0
    %891 = vmatprep.subr.mxu0 0.0
    %892 = vmatpush1.msra.mxu0 0.0
    %893 = vmatprep.subr.mxu0 0.0
    %894 = vmatpush1.msra.mxu0 0.0
    %895 = vmatprep.subr.mxu0 0.0
    %896 = vmatpush1.msra.mxu0 0.0
    %897 = vmatprep.subr.mxu0 0.0
    %898 = vmatpush1.msra.mxu0 0.0
    %899 = vmatprep.subr.mxu0 0.0
    %900 = vmatpush1.msra.mxu0 0.0
    %901 = vmatprep.subr.mxu0 0.0
    %902 = vmatpush1.msra.mxu0 0.0
    %903 = vmatprep.subr.mxu0 0.0
    %904 = vmatpush1.msra.mxu0 0.0
    %905 = vmatprep.subr.mxu0 0.0
    %906 = vmatpush1.msra.mxu0 0.0
    %907 = vmatprep.subr.mxu0 0.0
    %908 = vmatpush1.msra.mxu0 0.0
    %909 = vmatprep.subr.mxu0 0.0
    %910 = vmatpush1.msra.mxu0 0.0
    %911 = vmatprep.subr.mxu0 0.0
    %912 = vmatpush1.msra.mxu0 0.0
    %913 = vmatprep.subr.mxu0 0.0
    %914 = vmatpush1.msra.mxu0 0.0
    %915 = vmatprep.subr.mxu0 0.0
    %916 = vmatpush1.msra.mxu0 0.0
    %917 = vmatprep.subr.mxu0 0.0
    %918 = vmatpush1.msra.mxu0 0.0
    %919 = vmatprep.subr.mxu0 0.0
    %920 = vmatpush1.msra.mxu0 0.0
    %921 = vmatprep.subr.mxu0 0.0
    %922 = vmatpush1.msra.mxu0 0.0
    %923 = vmatprep.subr.mxu0 0.0
    %924 = vmatpush1.msra.mxu0 0.0
    %925 = vmatprep.subr.mxu0 0.0
    %926 = vmatpush1.msra.mxu0 0.0
    %927 = vmatprep.subr.mxu0 0.0
    %928 = vmatpush1.msra.mxu0 0.0
    %929 = vmatprep.subr.mxu0 0.0
    %930 = vmatpush1.msra.mxu0 0.0
    %931 = vmatprep.subr.mxu0 0.0
    %932 = vmatpush1.msra.mxu0 0.0
    %933 = vmatprep.subr.mxu0 0.0
    %934 = vmatpush1.msra.mxu0 0.0
    %935 = vmatprep.subr.mxu0 0.0
    %936 = vmatpush1.msra.mxu0 0.0
    %937 = vmatprep.subr.mxu0 0.0
    %938 = vmatpush1.msra.mxu0 0.0
    %939 = vmatprep.mubr.f32.mxu0 0.0
    %940 = vmatmul.mubr.f32.gmra.mrb[0].mxu0 %v871
    %v941 = vpop.f32.mrb[0].mxu0
    %v942 = vadd.f32 0.0, %v941
    %v943 = vpop.f32.mrb[0].mxu0
    %944 = vdwg.mxu0
    %v946 = vsel %vm674, %v718, 0
    %v948 = vsel %vm722, %v349, 0
    %950 = vmatprep.subr.mxu0 0.0
    %951 = vmatpush1.msra.mxu0 %v315
    %952 = vmatprep.subr.mxu0 0.0
    %953 = vmatpush1.msra.mxu0 %v948
    %954 = vmatprep.subr.mxu0 0.0
    %955 = vmatpush1.msra.mxu0 0.0
    %956 = vmatprep.subr.mxu0 0.0
    %957 = vmatpush1.msra.mxu0 0.0
    %958 = vmatprep.subr.mxu0 0.0
    %959 = vmatpush1.msra.mxu0 0.0
    %960 = vmatprep.subr.mxu0 0.0
    %961 = vmatpush1.msra.mxu0 0.0
    %962 = vmatprep.subr.mxu0 0.0
    %963 = vmatpush1.msra.mxu0 0.0
    %964 = vmatprep.subr.mxu0 0.0
    %965 = vmatpush1.msra.mxu0 0.0
    %966 = vmatprep.subr.mxu0 0.0
    %967 = vmatpush1.msra.mxu0 0.0
    %968 = vmatprep.subr.mxu0 0.0
    %969 = vmatpush1.msra.mxu0 0.0
    %970 = vmatprep.subr.mxu0 0.0
    %971 = vmatpush1.msra.mxu0 0.0
    %972 = vmatprep.subr.mxu0 0.0
    %973 = vmatpush1.msra.mxu0 0.0
    %974 = vmatprep.subr.mxu0 0.0
    %975 = vmatpush1.msra.mxu0 0.0
    %976 = vmatprep.subr.mxu0 0.0
    %977 = vmatpush1.msra.mxu0 0.0
    %978 = vmatprep.subr.mxu0 0.0
    %979 = vmatpush1.msra.mxu0 0.0
    %980 = vmatprep.subr.mxu0 0.0
    %981 = vmatpush1.msra.mxu0 0.0
    %982 = vmatprep.subr.mxu0 0.0
    %983 = vmatpush1.msra.mxu0 0.0
    %984 = vmatprep.subr.mxu0 0.0
    %985 = vmatpush1.msra.mxu0 0.0
    %986 = vmatprep.subr.mxu0 0.0
    %987 = vmatpush1.msra.mxu0 0.0
    %988 = vmatprep.subr.mxu0 0.0
    %989 = vmatpush1.msra.mxu0 0.0
    %990 = vmatprep.subr.mxu0 0.0
    %991 = vmatpush1.msra.mxu0 0.0
    %992 = vmatprep.subr.mxu0 0.0
    %993 = vmatpush1.msra.mxu0 0.0
    %994 = vmatprep.subr.mxu0 0.0
    %995 = vmatpush1.msra.mxu0 0.0
    %996 = vmatprep.subr.mxu0 0.0
    %997 = vmatpush1.msra.mxu0 0.0
    %998 = vmatprep.subr.mxu0 0.0
    %999 = vmatpush1.msra.mxu0 0.0
    %1000 = vmatprep.subr.mxu0 0.0
    %1001 = vmatpush1.msra.mxu0 0.0
    %1002 = vmatprep.subr.mxu0 0.0
    %1003 = vmatpush1.msra.mxu0 0.0
    %1004 = vmatprep.subr.mxu0 0.0
    %1005 = vmatpush1.msra.mxu0 0.0
    %1006 = vmatprep.subr.mxu0 0.0
    %1007 = vmatpush1.msra.mxu0 0.0
    %1008 = vmatprep.subr.mxu0 0.0
    %1009 = vmatpush1.msra.mxu0 0.0
    %1010 = vmatprep.subr.mxu0 0.0
    %1011 = vmatpush1.msra.mxu0 0.0
    %1012 = vmatprep.subr.mxu0 0.0
    %1013 = vmatpush1.msra.mxu0 0.0
    %1014 = vmatprep.mubr.f32.mxu0 0.0
    %1015 = vmatmul.mubr.f32.gmra.mrb[0].mxu0 %v946
    %v1016 = vpop.f32.mrb[0].mxu0
    %v1017 = vadd.f32 0.0, %v1016
    %v1018 = vpop.f32.mrb[0].mxu0
    %1019 = vdwg.mxu0
    %v1020 = vcombine.low %v792, %v942
    %v1021 = vcombine.high %v792, %v942
    %v1023 = vunpack.c.l.s4 1983009808
    %v1024 = vunpack.c.0.s8 %v1023
    %v1025 = vlaneseq
    %v1026 = vshrl.u32 %v1025, 7
    %v1027 = vsub.s32 %v1024, %v1026
    %v1028 = vrot.slane %v1020, %v1027
    %v1030 = vunpack.c.l.s4 1983009808
    %v1031 = vunpack.c.0.s8 %v1030
    %v1032 = vlaneseq
    %v1033 = vshrl.u32 %v1032, 7
    %v1034 = vsub.s32 %v1031, %v1033
    %v1035 = vrot.slane %v1021, %v1034
    %v1036 = vcombine.low %v867, %v1017
    %v1037 = vcombine.high %v867, %v1017
    %v1039 = vunpack.c.l.s4 1983009808
    %v1040 = vunpack.c.0.s8 %v1039
    %v1041 = vlaneseq
    %v1042 = vshrl.u32 %v1041, 7
    %v1043 = vsub.s32 %v1040, %v1042
    %v1044 = vrot.slane %v1036, %v1043
    %v1046 = vunpack.c.l.s4 1983009808
    %v1047 = vunpack.c.0.s8 %v1046
    %v1048 = vlaneseq
    %v1049 = vshrl.u32 %v1048, 7
    %v1050 = vsub.s32 %v1047, %v1049
    %v1051 = vrot.slane %v1037, %v1050
    %v1052 = vcombine.low %v1028, %v1044
    %v1053 = vcombine.high %v1028, %v1044
    %v1055 = vunpack.c.l.s4 1934713408
    %v1056 = vunpack.c.0.s8 %v1055
    %v1057 = vlaneseq
    %v1058 = vshrl.u32 %v1057, 7
    %v1059 = vsub.s32 %v1056, %v1058
    %v1060 = vrot.slane %v1052, %v1059
    %v1062 = vunpack.c.l.s4 1934713408
    %v1063 = vunpack.c.0.s8 %v1062
    %v1064 = vlaneseq
    %v1065 = vshrl.u32 %v1064, 7
    %v1066 = vsub.s32 %v1063, %v1065
    %v1067 = vrot.slane %v1053, %v1066
    %v1068 = vcombine.low %v1035, %v1051
    %v1069 = vcombine.high %v1035, %v1051
    %v1071 = vunpack.c.l.s4 1934713408
    %v1072 = vunpack.c.0.s8 %v1071
    %v1073 = vlaneseq
    %v1074 = vshrl.u32 %v1073, 7
    %v1075 = vsub.s32 %v1072, %v1074
    %v1076 = vrot.slane %v1068, %v1075
    %v1078 = vunpack.c.l.s4 1934713408
    %v1079 = vunpack.c.0.s8 %v1078
    %v1080 = vlaneseq
    %v1081 = vshrl.u32 %v1080, 7
    %v1082 = vsub.s32 %v1079, %v1081
    %v1083 = vrot.slane %v1069, %v1082
    %v1084 = vcombine.high %v1060, 0.0
    %v1085 = vcombine.high %v1067, 0.0
    %v1086 = vcombine.high %v1076, 0.0
    %v1087 = vcombine.high %v1083, 0.0
    %v1088 = vld [vmem:[%s3] sm:$0xff]
    %v1089 = vld [vmem:[%s3 + $0x8] sm:$0xff]
    %v1090 = vld [vmem:[%s3 + $0x10] sm:$0xff]
    %v1091 = vld [vmem:[%s3 + $0x18] sm:$0xff]
    %v1092 = vld [vmem:[%s4] sm:$0xff]
    %v1093 = vld [vmem:[%s4 + $0x8] sm:$0xff]
    %v1094 = vld [vmem:[%s4 + $0x10] sm:$0xff]
    %v1095 = vld [vmem:[%s4 + $0x18] sm:$0xff]
    %1096 = vmatprep.subr.mxu0 0.0
    %1097 = vmatpush1.msra.mxu0 %v1092
    %1098 = vmatprep.subr.mxu0 0.0
    %1099 = vmatpush1.msra.mxu0 %v1093
    %1100 = vmatprep.subr.mxu0 0.0
    %1101 = vmatpush1.msra.mxu0 %v1094
    %1102 = vmatprep.subr.mxu0 0.0
    %1103 = vmatpush1.msra.mxu0 %v1095
    %1104 = vmatprep.subr.mxu0 0.0
    %1105 = vmatpush1.msra.mxu0 0.0
    %1106 = vmatprep.subr.mxu0 0.0
    %1107 = vmatpush1.msra.mxu0 0.0
    %1108 = vmatprep.subr.mxu0 0.0
    %1109 = vmatpush1.msra.mxu0 0.0
    %1110 = vmatprep.subr.mxu0 0.0
    %1111 = vmatpush1.msra.mxu0 0.0
    %1112 = vmatprep.subr.mxu0 0.0
    %1113 = vmatpush1.msra.mxu0 0.0
    %1114 = vmatprep.subr.mxu0 0.0
    %1115 = vmatpush1.msra.mxu0 0.0
    %1116 = vmatprep.subr.mxu0 0.0
    %1117 = vmatpush1.msra.mxu0 0.0
    %1118 = vmatprep.subr.mxu0 0.0
    %1119 = vmatpush1.msra.mxu0 0.0
    %1120 = vmatprep.subr.mxu0 0.0
    %1121 = vmatpush1.msra.mxu0 0.0
    %1122 = vmatprep.subr.mxu0 0.0
    %1123 = vmatpush1.msra.mxu0 0.0
    %1124 = vmatprep.subr.mxu0 0.0
    %1125 = vmatpush1.msra.mxu0 0.0
    %1126 = vmatprep.subr.mxu0 0.0
    %1127 = vmatpush1.msra.mxu0 0.0
    %1128 = vmatprep.subr.mxu0 0.0
    %1129 = vmatpush1.msra.mxu0 0.0
    %1130 = vmatprep.subr.mxu0 0.0
    %1131 = vmatpush1.msra.mxu0 0.0
    %1132 = vmatprep.subr.mxu0 0.0
    %1133 = vmatpush1.msra.mxu0 0.0
    %1134 = vmatprep.subr.mxu0 0.0
    %1135 = vmatpush1.msra.mxu0 0.0
    %1136 = vmatprep.subr.mxu0 0.0
    %1137 = vmatpush1.msra.mxu0 0.0
    %1138 = vmatprep.subr.mxu0 0.0
    %1139 = vmatpush1.msra.mxu0 0.0
    %1140 = vmatprep.subr.mxu0 0.0
    %1141 = vmatpush1.msra.mxu0 0.0
    %1142 = vmatprep.subr.mxu0 0.0
    %1143 = vmatpush1.msra.mxu0 0.0
    %1144 = vmatprep.subr.mxu0 0.0
    %1145 = vmatpush1.msra.mxu0 0.0
    %1146 = vmatprep.subr.mxu0 0.0
    %1147 = vmatpush1.msra.mxu0 0.0
    %1148 = vmatprep.subr.mxu0 0.0
    %1149 = vmatpush1.msra.mxu0 0.0
    %1150 = vmatprep.subr.mxu0 0.0
    %1151 = vmatpush1.msra.mxu0 0.0
    %1152 = vmatprep.subr.mxu0 0.0
    %1153 = vmatpush1.msra.mxu0 0.0
    %1154 = vmatprep.subr.mxu0 0.0
    %1155 = vmatpush1.msra.mxu0 0.0
    %1156 = vmatprep.subr.mxu0 0.0
    %1157 = vmatpush1.msra.mxu0 0.0
    %1158 = vmatprep.subr.mxu0 0.0
    %1159 = vmatpush1.msra.mxu0 0.0
    %1160 = vmatprep.mubr.f32.mxu0 0.0
    %1161 = vmatmul.mubr.f32.gmra.mrb[0].mxu0 %v75
    %v1162 = vpop.f32.mrb[0].mxu0
    %v1163 = vadd.f32 0.0, %v1162
    %v1164 = vpop.f32.mrb[0].mxu0
    %1165 = vmatprep.mubr.f32.mxu0 0.0
    %1166 = vmatmul.mubr.f32.gmra.mrb[0].mxu0 %v77
    %v1167 = vpop.f32.mrb[0].mxu0
    %v1168 = vadd.f32 0.0, %v1167
    %v1169 = vpop.f32.mrb[0].mxu0
    %1170 = vmatprep.mubr.f32.mxu0 0.0
    %1171 = vmatmul.mubr.f32.gmra.mrb[0].mxu0 %v79
    %v1172 = vpop.f32.mrb[0].mxu0
    %v1173 = vadd.f32 0.0, %v1172
    %v1174 = vpop.f32.mrb[0].mxu0
    %1175 = vmatprep.mubr.f32.mxu0 0.0
    %1176 = vmatmul.mubr.f32.gmra.mrb[0].mxu0 %v81
    %v1177 = vpop.f32.mrb[0].mxu0
    %v1178 = vadd.f32 0.0, %v1177
    %v1179 = vpop.f32.mrb[0].mxu0
    %1180 = vdwg.mxu0
    %v1189 = vcombine.low %v1060, %v1084
    %v1190 = vcombine.low %v1067, %v1085
    %v1191 = vcombine.low %v1076, %v1086
    %v1192 = vcombine.low %v1083, %v1087
    %v1193 = vsel %vm74, %v1189, 0
    %v1195 = vsel %vm74, %v1190, 0
    %v1197 = vsel %vm74, %v1191, 0
    %v1199 = vsel %vm74, %v1192, 0
    %1201 = vmatprep.subr.mxu0 0.0
    %1202 = vmatpush1.msra.mxu0 %v1088
    %1203 = vmatprep.subr.mxu0 0.0
    %1204 = vmatpush1.msra.mxu0 %v1089
    %1205 = vmatprep.subr.mxu0 0.0
    %1206 = vmatpush1.msra.mxu0 %v1090
    %1207 = vmatprep.subr.mxu0 0.0
    %1208 = vmatpush1.msra.mxu0 %v1091
    %1209 = vmatprep.subr.mxu0 0.0
    %1210 = vmatpush1.msra.mxu0 0.0
    %1211 = vmatprep.subr.mxu0 0.0
    %1212 = vmatpush1.msra.mxu0 0.0
    %1213 = vmatprep.subr.mxu0 0.0
    %1214 = vmatpush1.msra.mxu0 0.0
    %1215 = vmatprep.subr.mxu0 0.0
    %1216 = vmatpush1.msra.mxu0 0.0
    %1217 = vmatprep.subr.mxu0 0.0
    %1218 = vmatpush1.msra.mxu0 0.0
    %1219 = vmatprep.subr.mxu0 0.0
    %1220 = vmatpush1.msra.mxu0 0.0
    %1221 = vmatprep.subr.mxu0 0.0
    %1222 = vmatpush1.msra.mxu0 0.0
    %1223 = vmatprep.subr.mxu0 0.0
    %1224 = vmatpush1.msra.mxu0 0.0
    %1225 = vmatprep.subr.mxu0 0.0
    %1226 = vmatpush1.msra.mxu0 0.0
    %1227 = vmatprep.subr.mxu0 0.0
    %1228 = vmatpush1.msra.mxu0 0.0
    %1229 = vmatprep.subr.mxu0 0.0
    %1230 = vmatpush1.msra.mxu0 0.0
    %1231 = vmatprep.subr.mxu0 0.0
    %1232 = vmatpush1.msra.mxu0 0.0
    %1233 = vmatprep.subr.mxu0 0.0
    %1234 = vmatpush1.msra.mxu0 0.0
    %1235 = vmatprep.subr.mxu0 0.0
    %1236 = vmatpush1.msra.mxu0 0.0
    %1237 = vmatprep.subr.mxu0 0.0
    %1238 = vmatpush1.msra.mxu0 0.0
    %1239 = vmatprep.subr.mxu0 0.0
    %1240 = vmatpush1.msra.mxu0 0.0
    %1241 = vmatprep.subr.mxu0 0.0
    %1242 = vmatpush1.msra.mxu0 0.0
    %1243 = vmatprep.subr.mxu0 0.0
    %1244 = vmatpush1.msra.mxu0 0.0
    %1245 = vmatprep.subr.mxu0 0.0
    %1246 = vmatpush1.msra.mxu0 0.0
    %1247 = vmatprep.subr.mxu0 0.0
    %1248 = vmatpush1.msra.mxu0 0.0
    %1249 = vmatprep.subr.mxu0 0.0
    %1250 = vmatpush1.msra.mxu0 0.0
    %1251 = vmatprep.subr.mxu0 0.0
    %1252 = vmatpush1.msra.mxu0 0.0
    %1253 = vmatprep.subr.mxu0 0.0
    %1254 = vmatpush1.msra.mxu0 0.0
    %1255 = vmatprep.subr.mxu0 0.0
    %1256 = vmatpush1.msra.mxu0 0.0
    %1257 = vmatprep.subr.mxu0 0.0
    %1258 = vmatpush1.msra.mxu0 0.0
    %1259 = vmatprep.subr.mxu0 0.0
    %1260 = vmatpush1.msra.mxu0 0.0
    %1261 = vmatprep.subr.mxu0 0.0
    %1262 = vmatpush1.msra.mxu0 0.0
    %1263 = vmatprep.subr.mxu0 0.0
    %1264 = vmatpush1.msra.mxu0 0.0
    %1265 = vmatprep.mubr.f32.mxu0 0.0
    %1266 = vmatmul.mubr.f32.gmra.mrb[0].mxu0 %v1193
    %v1267 = vpop.f32.mrb[0].mxu0
    %v1268 = vadd.f32 %v1163, %v1267
    %v1269 = vpop.f32.mrb[0].mxu0
    %1270 = vmatprep.mubr.f32.mxu0 0.0
    %1271 = vmatmul.mubr.f32.gmra.mrb[0].mxu0 %v1195
    %v1272 = vpop.f32.mrb[0].mxu0
    %v1273 = vadd.f32 %v1168, %v1272
    %v1274 = vpop.f32.mrb[0].mxu0
    %1275 = vmatprep.mubr.f32.mxu0 0.0
    %1276 = vmatmul.mubr.f32.gmra.mrb[0].mxu0 %v1197
    %v1277 = vpop.f32.mrb[0].mxu0
    %v1278 = vadd.f32 %v1173, %v1277
    %v1279 = vpop.f32.mrb[0].mxu0
    %1280 = vmatprep.mubr.f32.mxu0 0.0
    %1281 = vmatmul.mubr.f32.gmra.mrb[0].mxu0 %v1199
    %v1282 = vpop.f32.mrb[0].mxu0
    %v1283 = vadd.f32 %v1178, %v1282
    %v1284 = vpop.f32.mrb[0].mxu0
    %1285 = vdwg.mxu0
    %v1286 = vld [vmem:[%s5] sm:$0x1]
    %v1288 = vlaneseq
    %v1289 = vshrl.u32 %v1288, 7
    %v1290 = vsub.s32 0, %v1289
    %v1291 = vrot.slane %v1286, %v1290
    %v1293 = vadd.f32 %v1268, %v1291
    %v1294 = vadd.f32 %v1273, %v1291
    %v1295 = vadd.f32 %v1278, %v1291
    %v1296 = vadd.f32 %v1283, %v1291
    %v1297 = vtanh.pop %v1293
    %v1298 = vtanh.pop %v1294
    %v1299 = vtanh.pop %v1295
    %v1300 = vtanh.pop %v1296
    %v1305 = vcombine.high %v1297, %v1297
    %v1306 = vcombine.high %v1298, %v1298
    %v1307 = vcombine.high %v1299, %v1299
    %v1308 = vcombine.high %v1300, %v1300
    %vm1313 = vcmask 125952
    %1314 = vst.msk [vmem:[#allocation5] sm:$0xf] %vm1313, %v1297
    %1315 = vst.msk [vmem:[#allocation5 + $0x4] sm:$0xf] %vm1313, %v1305
    %1316 = vst.msk [vmem:[#allocation5 + $0x8] sm:$0xf] %vm1313, %v1298
    %1317 = vst.msk [vmem:[#allocation5 + $0xc] sm:$0xf] %vm1313, %v1306
    %1318 = vst.msk [vmem:[#allocation5 + $0x10] sm:$0xf] %vm1313, %v1299
    %1319 = vst.msk [vmem:[#allocation5 + $0x14] sm:$0xf] %vm1313, %v1307
    %1320 = vst.msk [vmem:[#allocation5 + $0x18] sm:$0xf] %vm1313, %v1300
    %1321 = vst.msk [vmem:[#allocation5 + $0x1c] sm:$0xf] %vm1313, %v1308
    // Predicated region
    $region30: #{tpu_custom_call.1} parent=1 // pred_check
      _
    $region31: #{tpu_custom_call.1} parent=1 // pred_check_branch
      %1323 = sbr.rel (0) target = $region33
    $region32: #{tpu_custom_call.1} parent=1 // pred_region
      %s1325 = ssub.s32 512, 512
      %1326 = vsyncadd [#allocation4], %s1325
      %s1327 = sshll.u32 [#allocation5], 4
      %s1328 = int_to_ptr.vmem [resolvable:$true] %s1327
      %1333 = dma.vmem_to_hbm [thread:$0]  %s1328, 512, %s6, [#allocation4], 64, 64, 4
    $region33: #{tpu_custom_call.1} parent=1 // pred_fallthru
      _
    // Predicated region
    $region34: #{tpu_custom_call.1} parent=1 // pred_check
      _
    $region35: #{tpu_custom_call.1} parent=1 // pred_check_branch
      %1335 = sbr.rel (0) target = $region37
    $region36: #{tpu_custom_call.1} parent=1 // pred_region
      %1336 = dma.done [#allocation4], 512
    $region37: #{tpu_custom_call.1} parent=1 // pred_fallthru
      _
    %1337 = vsyncpa [#allocation3], 1
    %1338 = vsyncpa [#allocation4], 1

</llo_original>
